<compile_context>
chip_gen: v7x
topology: tpu7x:2x2x1
jax: 0.10.0
libtpu: 0.0.40
codegen_flags: <defaults>
</compile_context>

<pallas_src>
import functools

import jax
import jax.numpy as jnp
from jax.experimental import pallas as pl
from jax.experimental.pallas import tpu as pltpu


# --------------------------------------------------------------------------
# VMEM budgeting / tile selection
# --------------------------------------------------------------------------

def _vmem_budget():
    """(per-step byte budget, vmem_limit_bytes) derived from the chip's VMEM."""
    phys = 64 * 1024 * 1024                       # conservative default (v7x physical)
    try:
        info = pltpu.get_tpu_info()
        for attr in ("vmem_capacity_bytes", "vmem_size_bytes"):
            v = getattr(info, attr, None)
            if v:
                phys = int(v)
                break
    except Exception:
        pass
    # v5e/v6e (128 MiB phys) -> 96 MiB limit; v7x (64 MiB phys) -> 48 MiB limit.
    limit = min(int(phys * 0.75), 96 * 1024 * 1024)
    budget = int(limit * 0.65)                    # headroom for compiler temporaries
    return budget, limit


def _tile_bytes(rows, D, S, q_bytes):
    """Rough VMEM footprint of one grid step (double-buffered blocks + temps)."""
    q_blk = 2 * rows * D * q_bytes        # query block, 2-deep pipeline
    out_blk = 2 * rows * D * 4            # f32 output block, 2-deep pipeline
    temps = 3 * rows * S * 4              # logits / exp / attn f32 intermediates
    weights = 2 * 2 * D * S * q_bytes     # wkT + wvT (constant index, still 2-buffered)
    return q_blk + out_blk + temps + weights


def _pick_batch_tile(B, N, D, S, q_bytes, budget, target_rows=2048):
    """Largest batch fold tb (divisor of B) whose grid step fits the VMEM budget.

    tb is capped at B//2 when B >= 2 so the grid has >= 2 steps (keeps both
    v7x TensorCores busy).  Caller guarantees N % 8 == 0 so the in-kernel
    (rows,S)<->(tb,N,S) reshape stays a free view.  Returns None when even
    tb == 1 overflows the budget (caller switches to the two-pass kernel).
    """
    max_tb = max(1, B // 2) if B >= 2 else B
    best = None
    for cand in range(1, max_tb + 1):
        if B % cand:
            continue
        rows = cand * N
        if _tile_bytes(rows, D, S, q_bytes) > budget:
            break
        best = cand
        if rows >= target_rows:
            break
    return best


def _pick_seq_tile(N, D, S, q_bytes, budget, target_rows=2048):
    """Largest N tile (multiple of 8 dividing N) fitting the VMEM budget."""
    best = None
    for tn in range(8, N + 1, 8):
        if N % tn:
            continue
        over = _tile_bytes(tn, D, S, q_bytes) > budget
        if over and best is not None:
            break
        best = tn
        if over or tn >= target_rows:
            break
    return best


# --------------------------------------------------------------------------
# Kernels
# --------------------------------------------------------------------------

def _ea_fused_kernel(q_ref, wkT_ref, wvT_ref, o_ref, *, tb, n):
    """Single-pass path: whole sequence for tb batch elements in one block.

    q_ref:   (tb*N, D)  queries (f32 or bf16), batch folded into the MXU M dim
    wkT_ref: (D, S)     pre-transposed mk.weight (VMEM-resident across grid)
    wvT_ref: (S, D)     pre-transposed mv.weight (VMEM-resident across grid)
    o_ref:   (tb*N, D)  f32 output
    """
    s = wkT_ref.shape[1]
    # attn = q @ Wk^T   (MXU, f32 accumulation)
    logits = jnp.dot(q_ref[...], wkT_ref[...], preferred_element_type=jnp.float32)

    if tb > 1:
        logits3 = logits.reshape(tb, n, s)            # free view (N % 8 == 0)
        m = jnp.max(logits3, axis=1, keepdims=True)   # softmax over N (dim=1)
        e = jnp.exp(logits3 - m)
        attn = e / jnp.sum(e, axis=1, keepdims=True)
        attn = attn / jnp.sum(attn, axis=2, keepdims=True)   # renorm over S
        attn = attn.reshape(tb * n, s)
    else:
        m = jnp.max(logits, axis=0, keepdims=True)    # softmax over N
        e = jnp.exp(logits - m)
        attn = e / jnp.sum(e, axis=0, keepdims=True)
        attn = attn / jnp.sum(attn, axis=1, keepdims=True)   # renorm over S

    out = jnp.dot(attn.astype(wvT_ref.dtype), wvT_ref[...],
                  preferred_element_type=jnp.float32)
    o_ref[...] = out.astype(o_ref.dtype)


def _ea_two_pass_kernel(q_ref, wkT_ref, wvT_ref, o_ref, m_ref, l_ref):
    """Two-pass N-tiled path for sequences too large for one VMEM block.

    grid = (B, 2, N // tn); pass 0 accumulates softmax stats over N, pass 1
    recomputes the q@WkT tile and emits output tiles.

    q_ref:   (tn, D)  query tile of one batch element
    o_ref:   (tn, D)  f32 output tile (written in pass 1 only)
    m_ref:   (1, S)   running max over N, per s        (VMEM scratch)
    l_ref:   (1, S)   running sum of exp over N, per s (VMEM scratch)
    """
    phase = pl.program_id(1)
    n_idx = pl.program_id(2)

    logits = jnp.dot(q_ref[...], wkT_ref[...],
                     preferred_element_type=jnp.float32)          # (tn, S)

    @pl.when(jnp.logical_and(phase == 0, n_idx == 0))
    def _init():
        m_ref[...] = jnp.full(m_ref.shape, -jnp.inf, dtype=m_ref.dtype)
        l_ref[...] = jnp.zeros(l_ref.shape, dtype=l_ref.dtype)

    @pl.when(phase == 0)
    def _stats():
        m_old = m_ref[...]
        m_new = jnp.maximum(m_old, jnp.max(logits, axis=0, keepdims=True))
        l_ref[...] = (l_ref[...] * jnp.exp(m_old - m_new)
                      + jnp.sum(jnp.exp(logits - m_new), axis=0, keepdims=True))
        m_ref[...] = m_new

    @pl.when(phase == 1)
    def _emit():
        attn = jnp.exp(logits - m_ref[...]) / l_ref[...]           # softmax over N
        attn = attn / jnp.sum(attn, axis=1, keepdims=True)         # renorm over S
        out = jnp.dot(attn.astype(wvT_ref.dtype), wvT_ref[...],
                      preferred_element_type=jnp.float32)
        o_ref[...] = out.astype(o_ref.dtype)


# --------------------------------------------------------------------------
# Wrapper
# --------------------------------------------------------------------------

def external_attention(queries, wk, wv, *, force_two_pass=False, force_tn=None):
    """queries: (B, N, d_model); wk = mk.weight (S, d_model); wv = mv.weight (d_model, S)."""
    B, N, D = queries.shape
    S = wk.shape[0]
    assert wk.shape == (S, D) and wv.shape == (D, S)

    # bf16 inputs keep bf16 HBM traffic + bf16 MXU operands (f32 accumulation,
    # f32 softmax); anything else runs the faithful f32 path (module's .float()).
    use_bf16 = queries.dtype == jnp.bfloat16
    op_dtype = jnp.bfloat16 if use_bf16 else jnp.float32
    q_bytes = jnp.dtype(op_dtype).itemsize

    wkT = jnp.transpose(wk).astype(op_dtype)   # (D, S), hoisted transpose
    wvT = jnp.transpose(wv).astype(op_dtype)   # (S, D), hoisted transpose
    q = queries.astype(op_dtype)

    budget, vmem_limit = _vmem_budget()

    two_pass = bool(force_two_pass)
    tb = None
    if not two_pass:
        if N % 8 != 0:
            # Only the full batch fold keeps the (rows, D) block legal.
            # TODO(synk): pad N to a multiple of 8 to tile unaligned sequences.
            tb = B
        else:
            tb = _pick_batch_tile(B, N, D, S, q_bytes, budget)
            if tb is None:
                two_pass = True

    if not two_pass:
        rows = tb * N
        q2d = q.reshape(B * N, D)
        out2d = pl.pallas_call(
            functools.partial(_ea_fused_kernel, tb=tb, n=N),
            out_shape=jax.ShapeDtypeStruct((B * N, D), jnp.float32),
            grid_spec=pltpu.PrefetchScalarGridSpec(
                num_scalar_prefetch=0,
                grid=(B // tb,),
                in_specs=[
                    pl.BlockSpec((rows, D), lambda i: (i, 0)),
                    pl.BlockSpec((D, S), lambda i: (0, 0)),   # VMEM-resident weight
                    pl.BlockSpec((S, D), lambda i: (0, 0)),   # VMEM-resident weight
                ],
                out_specs=pl.BlockSpec((rows, D), lambda i: (i, 0)),
            ),
            compiler_params=pltpu.CompilerParams(
                dimension_semantics=("parallel",),
                vmem_limit_bytes=vmem_limit,
            ),
        )(q2d, wkT, wvT)
        return out2d.reshape(B, N, D)

    # ---- two-pass N-tiled path ----
    assert N % 8 == 0, "two-pass path requires N % 8 == 0 (TODO(synk): pad N)"
    tn = force_tn if force_tn is not None else _pick_seq_tile(N, D, S, q_bytes, budget)
    assert N % tn == 0 and tn % 8 == 0
    n_tiles = N // tn

    out = pl.pallas_call(
        _ea_two_pass_kernel,
        out_shape=jax.ShapeDtypeStruct((B, N, D), jnp.float32),
        grid_spec=pltpu.PrefetchScalarGridSpec(
            num_scalar_prefetch=0,
            grid=(B, 2, n_tiles),                  # (batch, pass, n tile)
            in_specs=[
                pl.BlockSpec((None, tn, D), lambda b, p, n: (b, n, 0)),
                pl.BlockSpec((D, S), lambda b, p, n: (0, 0)),
                pl.BlockSpec((S, D), lambda b, p, n: (0, 0)),
            ],
            # During pass 0 the output index is parked at block (b, 0); it is
            # only advanced (and hence written back) in pass 1 after the block
            # has been stored, so no garbage / redundant HBM writes occur.
            out_specs=pl.BlockSpec((None, tn, D), lambda b, p, n: (b, n * p, 0)),
            scratch_shapes=[
                pltpu.VMEM((1, S), jnp.float32),   # running max over N
                pltpu.VMEM((1, S), jnp.float32),   # running sum of exp over N
            ],
        ),
        compiler_params=pltpu.CompilerParams(
            dimension_semantics=("parallel", "arbitrary", "arbitrary"),
            vmem_limit_bytes=vmem_limit,
        ),
    )(q, wkT, wvT)
    return out


def external_attention_ref(queries, wk, wv):
    """Plain-JAX reference mirroring the PyTorch forward."""
    q = queries.astype(jnp.float32)
    attn = jnp.einsum("bnd,sd->bns", q, wk)
    attn = jax.nn.softmax(attn, axis=1)                  # over N
    attn = attn / jnp.sum(attn, axis=2, keepdims=True)   # over S
    return jnp.einsum("bns,ds->bnd", attn, wv)


if __name__ == "__main__":
    # Small shapes consistent with the module: batch=2, seq=8, d_model=32, S=64
    B, N, D, S = 2, 8, 32, 64

    key = jax.random.PRNGKey(0)
    kq, kk, kv, kq2 = jax.random.split(key, 4)

    queries = jax.random.normal(kq, (B, N, D), dtype=jnp.float32)
    # nn.Linear weights initialized ~ Normal(0, 0.001), no bias (per init_weights)
    wk = 0.001 * jax.random.normal(kk, (S, D), dtype=jnp.float32)  # mk.weight
    wv = 0.001 * jax.random.normal(kv, (D, S), dtype=jnp.float32)  # mv.weight

    ref = external_attention_ref(queries, wk, wv)

    # 1) Fused single-block path (what the demo shapes select automatically).
    out = external_attention(queries, wk, wv)
    jax.block_until_ready(out)
    assert out.shape == (B, N, D)
    assert jnp.allclose(out, ref, atol=1e-5, rtol=1e-5), float(
        jnp.max(jnp.abs(out - ref)))

    # 2) Two-pass N-tiled path (auto-selected for large N that overflows the
    #    per-chip VMEM budget) -- exercised here at a small shape by forcing it.
    N2 = 32
    queries2 = jax.random.normal(kq2, (B, N2, D), dtype=jnp.float32)
    out2 = external_attention(queries2, wk, wv, force_two_pass=True, force_tn=8)
    jax.block_until_ready(out2)
    ref2 = external_attention_ref(queries2, wk, wv)
    assert jnp.allclose(out2, ref2, atol=1e-5, rtol=1e-5), float(
        jnp.max(jnp.abs(out2 - ref2)))

    # 3) bf16-query path: bf16 HBM traffic + bf16 MXU operands, f32 softmax.
    out3 = external_attention(queries.astype(jnp.bfloat16), wk, wv)
    jax.block_until_ready(out3)
    assert jnp.allclose(out3, ref, atol=1e-5, rtol=5e-2), float(
        jnp.max(jnp.abs(out3 - ref)))

    print("KERNEL_OK")
</pallas_src>

<mosaic_0001>
module attributes {stable_mosaic.version = 11 : i64} {
  func.func @_ea_fused_kernel(%arg0: i32, %arg1: memref<8x32xf32, #tpu.memory_space<vmem>>, %arg2: memref<32x64xf32, #tpu.memory_space<vmem>>, %arg3: memref<64x32xf32, #tpu.memory_space<vmem>>, %arg4: memref<8x32xf32, #tpu.memory_space<vmem>>) attributes {dimension_semantics = [#tpu.dimension_semantics<parallel>], iteration_bounds = array<i64: 2>, scalar_prefetch = 0 : i64, scratch_operands = 0 : i64, tpu.core_type = #tpu.core_type<tc>, window_params = [{transform_indices = @transform_0, window_bounds = array<i64: 8, 32>}, {pipeline_mode = #tpu.pipeline_mode<synchronous>, transform_indices = @transform_1, window_bounds = array<i64: 32, 64>}, {pipeline_mode = #tpu.pipeline_mode<synchronous>, transform_indices = @transform_2, window_bounds = array<i64: 64, 32>}, {transform_indices = @transform_3, window_bounds = array<i64: 8, 32>}]} {
    %c0 = arith.constant 0 : index
    %c0_0 = arith.constant 0 : index
    %0 = vector.load %arg1[%c0, %c0_0] : memref<8x32xf32, #tpu.memory_space<vmem>>, vector<8x32xf32>
    %c0_1 = arith.constant 0 : index
    %c0_2 = arith.constant 0 : index
    %1 = vector.load %arg2[%c0_1, %c0_2] : memref<32x64xf32, #tpu.memory_space<vmem>>, vector<32x64xf32>
    %cst = arith.constant dense<0.000000e+00> : vector<8x64xf32>
    %2 = tpu.matmul %0, %1, %cst {dimension_numbers = #tpu.dot_dimension_numbers<[1], [0], [0], [1], [0, 0, 1, 1], [], []>} : vector<8x32xf32>, vector<32x64xf32>, vector<8x64xf32> -> vector<8x64xf32>
    %cst_3 = arith.constant dense<0xFF800000> : vector<64xf32>
    %3 = vector.multi_reduction <maximumf>, %2, %cst_3 [0] : vector<8x64xf32> to vector<64xf32>
    %4 = vector.shape_cast %3 : vector<64xf32> to vector<1x64xf32>
    %5 = vector.broadcast %4 : vector<1x64xf32> to vector<8x64xf32>
    %6 = arith.subf %2, %5 : vector<8x64xf32>
    %7 = math.exp %6 : vector<8x64xf32>
    %cst_4 = arith.constant dense<0.000000e+00> : vector<64xf32>
    %8 = vector.multi_reduction <add>, %7, %cst_4 [0] : vector<8x64xf32> to vector<64xf32>
    %9 = vector.shape_cast %8 : vector<64xf32> to vector<1x64xf32>
    %10 = vector.broadcast %9 : vector<1x64xf32> to vector<8x64xf32>
    %11 = arith.divf %7, %10 : vector<8x64xf32>
    %cst_5 = arith.constant dense<0.000000e+00> : vector<8xf32>
    %12 = vector.multi_reduction <add>, %11, %cst_5 [1] : vector<8x64xf32> to vector<8xf32>
    %13 = vector.shape_cast %12 : vector<8xf32> to vector<8x1xf32>
    %14 = vector.broadcast %13 : vector<8x1xf32> to vector<8x64xf32>
    %15 = arith.divf %11, %14 : vector<8x64xf32>
    %c0_6 = arith.constant 0 : index
    %c0_7 = arith.constant 0 : index
    %16 = vector.load %arg3[%c0_6, %c0_7] : memref<64x32xf32, #tpu.memory_space<vmem>>, vector<64x32xf32>
    %cst_8 = arith.constant dense<0.000000e+00> : vector<8x32xf32>
    %17 = tpu.matmul %15, %16, %cst_8 {dimension_numbers = #tpu.dot_dimension_numbers<[1], [0], [0], [1], [0, 0, 1, 1], [], []>} : vector<8x64xf32>, vector<64x32xf32>, vector<8x32xf32> -> vector<8x32xf32>
    %c0_9 = arith.constant 0 : index
    %c0_10 = arith.constant 0 : index
    %18 = vector.load %arg4[%c0_9, %c0_10] : memref<8x32xf32, #tpu.memory_space<vmem>>, vector<8x32xf32>
    tpu.vector_store %arg4[%c0_9, %c0_10], %17 {strides = array<i32>} : memref<8x32xf32, #tpu.memory_space<vmem>>, vector<8x32xf32>,
    return
  }
  func.func @transform_0(%arg0: i32) -> (i32, i32) {
    %c0_i32 = arith.constant 0 : i32
    %c0_i32_0 = arith.constant 0 : i32
    return %arg0, %c0_i32 : i32, i32
  }
  func.func @transform_1(%arg0: i32) -> (i32, i32) {
    %c0_i32 = arith.constant 0 : i32
    %c0_i32_0 = arith.constant 0 : i32
    %c0_i32_1 = arith.constant 0 : i32
    return %c0_i32, %c0_i32_0 : i32, i32
  }
  func.func @transform_2(%arg0: i32) -> (i32, i32) {
    %c0_i32 = arith.constant 0 : i32
    %c0_i32_0 = arith.constant 0 : i32
    %c0_i32_1 = arith.constant 0 : i32
    return %c0_i32, %c0_i32_0 : i32, i32
  }
  func.func @transform_3(%arg0: i32) -> (i32, i32) {
    %c0_i32 = arith.constant 0 : i32
    %c0_i32_0 = arith.constant 0 : i32
    return %arg0, %c0_i32 : i32, i32
  }
}

</mosaic_0001>

<llo_original>
// kernel: tpu_custom_call.1
$region0: #{tpu_custom_call.1}
  #allocation0 [shape = 'u32[]', space=smem, size = 0x4, offset = 0x4, fixed_abs, tag = 'smem constant byte address 0x4 - core index']
  #allocation1 [shape = 'u32[144,128]{1,0:T(1,128)}', space=vmem, size = 0x12000, scoped, tag = 'internal scratch']
  %s0 = inlined_call_operand.vmem [shape: f32[16,32], index: 0, kind: input, shape index: {}]
  %s1 = inlined_call_operand.vmem [shape: f32[32,64], index: 1, kind: input, shape index: {}]
  %s2 = inlined_call_operand.vmem [shape: f32[64,32], index: 2, kind: input, shape index: {}]
  %s3 = inlined_call_operand.hbm [shape: f32[16,32], index: 3, kind: output, shape index: {}]
  %s4 = sld [smem:[#allocation0]]
  $region45: #{tpu_custom_call.1} parent=0
    _
  %s6 = ssub.s32 1, %s4
  %s7 = scalar_select 0, %s6, %s4
  $region1: #{tpu_custom_call.1} parent=0
    #allocation2 [shape = 'u8[8192]{0}', space=vmem, size = 0x2000, scoped, tag = 'output window, operand 0']
    #allocation3 [shape = 's32[2]{0}', space=sflag, size = 0x8, scoped, tag = 'scoped memory for tpu_custom_call.1']
    %8 = vsyncpa [#allocation3], 0
    %s9 = scalar_lea.sflag [#allocation3], 1
    %10 = vsyncpa %s9, 0
    loop: start=0, step=1, limit=4
    $region2: #{tpu_custom_call.1} parent=1 // loop_pre_header
      _
    $region3: #{tpu_custom_call.1} parent=1 // loop_header
      %s12 = sphi 0, %s16
      %p13 = scmp.ge.s32.totalorder %s12, 4
      %s22 = sphi 0, %s24
      %s25 = sphi 0, %s22
      %s26 = sphi 0, %s25
      %s42 = sphi 0, %s26
      %s46 = sphi 0, %s46
      %s48 = sphi 0, %s46
      %s49 = sphi 0, %s48
      %s63 = sphi 0, %s49
      %s67 = sphi 0, %s67
      %s69 = sphi 0, %s67
      %s70 = sphi 0, %s69
      %s84 = sphi 0, %s70
      %s90 = sphi 0, %s92
      %s93 = sphi 0, %s90
      %s94 = sphi 0, %s93
      %s110 = sphi 0, %s94
    $region4: #{tpu_custom_call.1} parent=1 // loop_header_branch
      %15 = sbr.rel (%p13) target = $region8
    $region5: #{tpu_custom_call.1} parent=1 // loop_body
      %s17 = ssub.s32 %s12, 1
      %s18 = ssub.s32 %s12, 2
      %s19 = sadd.s32 %s12, 1
      %s20 = ssub.s32 %s12, %s19
      %p21 = scmp.eq.s32.totalorder %s20, 0
      %s23 = sadd.s32 %s22, 1
      %s24 = scalar_select %p21, %s22, %s23
      %p27 = pneg %p21
      %p28 = scmp.eq.s32.totalorder %s12, 1
      %p29 = por %p27, %p28
      %p30 = scmp.ne.s32.totalorder %s22, %s25
      %p31 = scmp.eq.s32.totalorder %s12, 0
      %p32 = por %p30, %p31
      %p33 = scmp.ne.s32.totalorder %s22, %s25
      %p34 = scmp.eq.s32.totalorder %s17, 1
      %p35 = por %p33, %p34
      %p36 = scmp.ne.s32.totalorder %s25, %s26
      %p37 = scmp.eq.s32.totalorder %s17, 0
      %p38 = por %p36, %p37
      %p39 = scmp.ne.s32.totalorder %s25, %s26
      %p40 = scmp.eq.s32.totalorder %s18, 1
      %p41 = por %p39, %p40
      %p43 = scmp.ne.s32.totalorder %s26, %s42
      %p44 = scmp.eq.s32.totalorder %s18, 0
      %p45 = por %p43, %p44
      %s47 = sadd.s32 %s46, 1
      %p50 = scmp.eq.s32.totalorder %s12, 1
      %p51 = scmp.ne.s32.totalorder %s46, %s48
      %p52 = scmp.eq.s32.totalorder %s12, 0
      %p53 = por %p51, %p52
      %p54 = scmp.ne.s32.totalorder %s46, %s48
      %p55 = scmp.eq.s32.totalorder %s17, 1
      %p56 = por %p54, %p55
      %p57 = scmp.ne.s32.totalorder %s48, %s49
      %p58 = scmp.eq.s32.totalorder %s17, 0
      %p59 = por %p57, %p58
      %p60 = scmp.ne.s32.totalorder %s48, %s49
      %p61 = scmp.eq.s32.totalorder %s18, 1
      %p62 = por %p60, %p61
      %p64 = scmp.ne.s32.totalorder %s49, %s63
      %p65 = scmp.eq.s32.totalorder %s18, 0
      %p66 = por %p64, %p65
      %s68 = sadd.s32 %s67, 1
      %p71 = scmp.eq.s32.totalorder %s12, 1
      %p72 = scmp.ne.s32.totalorder %s67, %s69
      %p73 = scmp.eq.s32.totalorder %s12, 0
      %p74 = por %p72, %p73
      %p75 = scmp.ne.s32.totalorder %s67, %s69
      %p76 = scmp.eq.s32.totalorder %s17, 1
      %p77 = por %p75, %p76
      %p78 = scmp.ne.s32.totalorder %s69, %s70
      %p79 = scmp.eq.s32.totalorder %s17, 0
      %p80 = por %p78, %p79
      %p81 = scmp.ne.s32.totalorder %s69, %s70
      %p82 = scmp.eq.s32.totalorder %s18, 1
      %p83 = por %p81, %p82
      %p85 = scmp.ne.s32.totalorder %s70, %s84
      %p86 = scmp.eq.s32.totalorder %s18, 0
      %p87 = por %p85, %p86
      %s88 = ssub.s32 %s12, %s19
      %p89 = scmp.eq.s32.totalorder %s88, 0
      %s91 = sadd.s32 %s90, 1
      %s92 = scalar_select %p89, %s90, %s91
      %p95 = pneg %p89
      %p96 = scmp.eq.s32.totalorder %s12, 1
      %p97 = por %p95, %p96
      %p98 = scmp.ne.s32.totalorder %s90, %s93
      %p99 = scmp.eq.s32.totalorder %s12, 0
      %p100 = por %p98, %p99
      %p101 = scmp.ne.s32.totalorder %s90, %s93
      %p102 = scmp.eq.s32.totalorder %s17, 1
      %p103 = por %p101, %p102
      %p104 = scmp.ne.s32.totalorder %s93, %s94
      %p105 = scmp.eq.s32.totalorder %s17, 0
      %p106 = por %p104, %p105
      %p107 = scmp.ne.s32.totalorder %s93, %s94
      %p108 = scmp.eq.s32.totalorder %s18, 1
      %p109 = por %p107, %p108
      %p111 = scmp.ne.s32.totalorder %s94, %s110
      %p112 = scmp.eq.s32.totalorder %s18, 0
      %p113 = por %p111, %p112
      %p114 = scmp.le.s32.totalorder 1, %s12
      %p115 = scmp.lt.s32.totalorder %s12, 3
      %p116 = pnand %p114, %p115
      %p117 = pneg %p116
      // Predicated region
      $region9: #{tpu_custom_call.1} parent=5 // pred_check
        _
      $region10: #{tpu_custom_call.1} parent=5 // pred_check_branch
        %119 = sbr.rel (%p116) target = $region12
      $region11: #{tpu_custom_call.1} parent=5 // pred_region
        %s120 = ssub.s32 %s12, 1
        // Predicated region
        $region13: #{tpu_custom_call.1} parent=11 // pred_check
          %p121 = pneg %p59
        $region14: #{tpu_custom_call.1} parent=11 // pred_check_branch
          %123 = sbr.rel (%p121) target = $region16
        $region15: #{tpu_custom_call.1} parent=11 // pred_region
          _
        $region16: #{tpu_custom_call.1} parent=11 // pred_fallthru
          _
        // Predicated region
        $region17: #{tpu_custom_call.1} parent=11 // pred_check
          %p124 = pneg %p80
        $region18: #{tpu_custom_call.1} parent=11 // pred_check_branch
          %126 = sbr.rel (%p124) target = $region20
        $region19: #{tpu_custom_call.1} parent=11 // pred_region
          _
        $region20: #{tpu_custom_call.1} parent=11 // pred_fallthru
          _
      $region12: #{tpu_custom_call.1} parent=5 // pred_fallthru
        _
      %p127 = scmp.lt.s32.totalorder %s12, 2
      // Predicated region
      $region21: #{tpu_custom_call.1} parent=5 // pred_check
        %p128 = pneg %p127
      $region22: #{tpu_custom_call.1} parent=5 // pred_check_branch
        %130 = sbr.rel (%p128) target = $region24
      $region23: #{tpu_custom_call.1} parent=5 // pred_region
        // Predicated region
        $region25: #{tpu_custom_call.1} parent=23 // pred_check
          %p131 = pneg %p32
        $region26: #{tpu_custom_call.1} parent=23 // pred_check_branch
          %133 = sbr.rel (%p131) target = $region28
        $region27: #{tpu_custom_call.1} parent=23 // pred_region
          %p134 = scmp.lt.s32.totalorder %s12, 1
          %s135 = scalar_select %p134, %s12, 1
          %s136 = smul.addr %s135, 8
          %s137 = scalar_lea.vmem %s0, %s136
        $region28: #{tpu_custom_call.1} parent=23 // pred_fallthru
          _
      $region24: #{tpu_custom_call.1} parent=5 // pred_fallthru
        _
      %p138 = scmp.le.s32.totalorder 1, %s12
      %p139 = scmp.lt.s32.totalorder %s12, 3
      %p140 = pnand %p138, %p139
      %p141 = pneg %p140
      // Predicated region
      $region29: #{tpu_custom_call.1} parent=5 // pred_check
        _
      $region30: #{tpu_custom_call.1} parent=5 // pred_check_branch
        %143 = sbr.rel (%p140) target = $region32
      $region31: #{tpu_custom_call.1} parent=5 // pred_region
        %s144 = ssub.s32 %s12, 1
        %p145 = scmp.lt.s32.totalorder %s17, 1
        %s146 = scalar_select %p145, %s17, 1
        %s147 = smul.addr %s146, 8
        %s148 = scalar_lea.vmem %s0, %s147
        %p149 = pneg %p38
        %p150 = pneg %p35
        %p151 = pneg %p59
        %p152 = pneg %p56
        %p153 = pneg %p80
        %p154 = pneg %p77
        %p155 = pneg %p106
        %p156 = pneg %p103
        %s157 = sand.u32 %s93, 1
        %s158 = scalar_lea.sflag [#allocation3], %s157
        %s159 = sand.u32 %s93, 1
        %s160 = smul.addr %s159, 8
        %s161 = scalar_lea.vmem [#allocation2], %s160
        %p162 = scmp.lt.s32.totalorder %s17, 1
        %s163 = scalar_select %p162, %s17, 1
        %s164 = smul.addr %s163, 8
        %s165 = scalar_lea.vmem %s0, %s164
        %v166 = vld [vmem:[%s165] sm:$0xff]
        %v167 = vld [vmem:[%s1] sm:$0xff]
        %v168 = vld [vmem:[%s1 + $0x8] sm:$0xff]
        %v169 = vld [vmem:[%s1 + $0x10] sm:$0xff]
        %v170 = vld [vmem:[%s1 + $0x18] sm:$0xff]
        %vm171 = vcmask 261120
        %v173 = vsel %vm171, %v166, 0
        %175 = vmatprep.subr.mxu0 0.0
        %176 = vmatpush1.msra.mxu0 %v167
        %177 = vmatprep.subr.mxu0 0.0
        %178 = vmatpush1.msra.mxu0 %v168
        %179 = vmatprep.subr.mxu0 0.0
        %180 = vmatpush1.msra.mxu0 %v169
        %181 = vmatprep.subr.mxu0 0.0
        %182 = vmatpush1.msra.mxu0 %v170
        %183 = vmatprep.subr.mxu0 0.0
        %184 = vmatpush1.msra.mxu0 0.0
        %185 = vmatprep.subr.mxu0 0.0
        %186 = vmatpush1.msra.mxu0 0.0
        %187 = vmatprep.subr.mxu0 0.0
        %188 = vmatpush1.msra.mxu0 0.0
        %189 = vmatprep.subr.mxu0 0.0
        %190 = vmatpush1.msra.mxu0 0.0
        %191 = vmatprep.subr.mxu0 0.0
        %192 = vmatpush1.msra.mxu0 0.0
        %193 = vmatprep.subr.mxu0 0.0
        %194 = vmatpush1.msra.mxu0 0.0
        %195 = vmatprep.subr.mxu0 0.0
        %196 = vmatpush1.msra.mxu0 0.0
        %197 = vmatprep.subr.mxu0 0.0
        %198 = vmatpush1.msra.mxu0 0.0
        %199 = vmatprep.subr.mxu0 0.0
        %200 = vmatpush1.msra.mxu0 0.0
        %201 = vmatprep.subr.mxu0 0.0
        %202 = vmatpush1.msra.mxu0 0.0
        %203 = vmatprep.subr.mxu0 0.0
        %204 = vmatpush1.msra.mxu0 0.0
        %205 = vmatprep.subr.mxu0 0.0
        %206 = vmatpush1.msra.mxu0 0.0
        %207 = vmatprep.subr.mxu0 0.0
        %208 = vmatpush1.msra.mxu0 0.0
        %209 = vmatprep.subr.mxu0 0.0
        %210 = vmatpush1.msra.mxu0 0.0
        %211 = vmatprep.subr.mxu0 0.0
        %212 = vmatpush1.msra.mxu0 0.0
        %213 = vmatprep.subr.mxu0 0.0
        %214 = vmatpush1.msra.mxu0 0.0
        %215 = vmatprep.subr.mxu0 0.0
        %216 = vmatpush1.msra.mxu0 0.0
        %217 = vmatprep.subr.mxu0 0.0
        %218 = vmatpush1.msra.mxu0 0.0
        %219 = vmatprep.subr.mxu0 0.0
        %220 = vmatpush1.msra.mxu0 0.0
        %221 = vmatprep.subr.mxu0 0.0
        %222 = vmatpush1.msra.mxu0 0.0
        %223 = vmatprep.subr.mxu0 0.0
        %224 = vmatpush1.msra.mxu0 0.0
        %225 = vmatprep.subr.mxu0 0.0
        %226 = vmatpush1.msra.mxu0 0.0
        %227 = vmatprep.subr.mxu0 0.0
        %228 = vmatpush1.msra.mxu0 0.0
        %229 = vmatprep.subr.mxu0 0.0
        %230 = vmatpush1.msra.mxu0 0.0
        %231 = vmatprep.subr.mxu0 0.0
        %232 = vmatpush1.msra.mxu0 0.0
        %233 = vmatprep.subr.mxu0 0.0
        %234 = vmatpush1.msra.mxu0 0.0
        %235 = vmatprep.subr.mxu0 0.0
        %236 = vmatpush1.msra.mxu0 0.0
        %237 = vmatprep.subr.mxu0 0.0
        %238 = vmatpush1.msra.mxu0 0.0
        %239 = vmatprep.mubr.f32.mxu0 0.0
        %240 = vmatmul.mubr.f32.gmra.mrb[0].mxu0 %v173
        %v241 = vpop.f32.mrb[0].mxu0
        %v242 = vadd.f32 0.0, %v241
        %v243 = vpop.f32.mrb[0].mxu0
        %244 = vdwg.mxu0
        %vm245 = vcmask 523264
        %v246 = vsel %vm245, %v242, -inf
        %v247 = vrot.slane %v246, 4
        %v248 = vmax.f32 %v246, %v247
        %v249 = vrot.slane %v248, 2
        %v250 = vmax.f32 %v248, %v249
        %v251 = vrot.slane %v250, 1
        %v252 = vmax.f32 %v250, %v251
        %v253 = vsub.f32 %v242, %v252
        %v254 = vmul.f32 %v253, 1.442695
        %v255 = vpow.pop %v254
        %v256 = vsel %vm245, %v255, 0.0
        %v257 = vrot.slane %v256, 4
        %v258 = vadd.f32 %v256, %v257
        %v259 = vrot.slane %v258, 2
        %v260 = vadd.f32 %v258, %v259
        %v261 = vrot.slane %v260, 1
        %v262 = vadd.f32 %v260, %v261
        %v263 = vrcp.pop %v262
        %v264 = vmul.f32 %v255, %v263
        %v265 = vsel %vm245, %v264, 0.0
        %266 = vadd.xlane.f32.xlu0 %v265
        %v267 = vpop.xlane.xlu0 %266
        %v268 = vrcp.pop %v267
        %v269 = vmul.f32 %v264, %v268
        %v270 = vld [vmem:[%s2] sm:$0xff]
        %v271 = vld [vmem:[%s2 + $0x8] sm:$0xff]
        %v272 = vld [vmem:[%s2 + $0x10] sm:$0xff]
        %v273 = vld [vmem:[%s2 + $0x18] sm:$0xff]
        %v274 = vld [vmem:[%s2 + $0x20] sm:$0xff]
        %v275 = vld [vmem:[%s2 + $0x28] sm:$0xff]
        %v276 = vld [vmem:[%s2 + $0x30] sm:$0xff]
        %v277 = vld [vmem:[%s2 + $0x38] sm:$0xff]
        %v279 = vsel %vm245, %v269, 0
        %281 = vmatprep.subr.mxu0 0.0
        %282 = vmatpush1.msra.mxu0 %v270
        %283 = vmatprep.subr.mxu0 0.0
        %284 = vmatpush1.msra.mxu0 %v271
        %285 = vmatprep.subr.mxu0 0.0
        %286 = vmatpush1.msra.mxu0 %v272
        %287 = vmatprep.subr.mxu0 0.0
        %288 = vmatpush1.msra.mxu0 %v273
        %289 = vmatprep.subr.mxu0 0.0
        %290 = vmatpush1.msra.mxu0 %v274
        %291 = vmatprep.subr.mxu0 0.0
        %292 = vmatpush1.msra.mxu0 %v275
        %293 = vmatprep.subr.mxu0 0.0
        %294 = vmatpush1.msra.mxu0 %v276
        %295 = vmatprep.subr.mxu0 0.0
        %296 = vmatpush1.msra.mxu0 %v277
        %297 = vmatprep.subr.mxu0 0.0
        %298 = vmatpush1.msra.mxu0 0.0
        %299 = vmatprep.subr.mxu0 0.0
        %300 = vmatpush1.msra.mxu0 0.0
        %301 = vmatprep.subr.mxu0 0.0
        %302 = vmatpush1.msra.mxu0 0.0
        %303 = vmatprep.subr.mxu0 0.0
        %304 = vmatpush1.msra.mxu0 0.0
        %305 = vmatprep.subr.mxu0 0.0
        %306 = vmatpush1.msra.mxu0 0.0
        %307 = vmatprep.subr.mxu0 0.0
        %308 = vmatpush1.msra.mxu0 0.0
        %309 = vmatprep.subr.mxu0 0.0
        %310 = vmatpush1.msra.mxu0 0.0
        %311 = vmatprep.subr.mxu0 0.0
        %312 = vmatpush1.msra.mxu0 0.0
        %313 = vmatprep.subr.mxu0 0.0
        %314 = vmatpush1.msra.mxu0 0.0
        %315 = vmatprep.subr.mxu0 0.0
        %316 = vmatpush1.msra.mxu0 0.0
        %317 = vmatprep.subr.mxu0 0.0
        %318 = vmatpush1.msra.mxu0 0.0
        %319 = vmatprep.subr.mxu0 0.0
        %320 = vmatpush1.msra.mxu0 0.0
        %321 = vmatprep.subr.mxu0 0.0
        %322 = vmatpush1.msra.mxu0 0.0
        %323 = vmatprep.subr.mxu0 0.0
        %324 = vmatpush1.msra.mxu0 0.0
        %325 = vmatprep.subr.mxu0 0.0
        %326 = vmatpush1.msra.mxu0 0.0
        %327 = vmatprep.subr.mxu0 0.0
        %328 = vmatpush1.msra.mxu0 0.0
        %329 = vmatprep.subr.mxu0 0.0
        %330 = vmatpush1.msra.mxu0 0.0
        %331 = vmatprep.subr.mxu0 0.0
        %332 = vmatpush1.msra.mxu0 0.0
        %333 = vmatprep.subr.mxu0 0.0
        %334 = vmatpush1.msra.mxu0 0.0
        %335 = vmatprep.subr.mxu0 0.0
        %336 = vmatpush1.msra.mxu0 0.0
        %337 = vmatprep.subr.mxu0 0.0
        %338 = vmatpush1.msra.mxu0 0.0
        %339 = vmatprep.subr.mxu0 0.0
        %340 = vmatpush1.msra.mxu0 0.0
        %341 = vmatprep.subr.mxu0 0.0
        %342 = vmatpush1.msra.mxu0 0.0
        %343 = vmatprep.subr.mxu0 0.0
        %344 = vmatpush1.msra.mxu0 0.0
        %345 = vmatprep.mubr.f32.mxu0 0.0
        %346 = vmatmul.mubr.f32.gmra.mrb[0].mxu0 %v279
        %v347 = vpop.f32.mrb[0].mxu0
        %v348 = vadd.f32 0.0, %v347
        %v349 = vpop.f32.mrb[0].mxu0
        %350 = vdwg.mxu0
        %351 = vst.msk [vmem:[%s161] sm:$0xff] %vm171, %v348
        %s352 = sand.u32 %s93, 1
        %s353 = scalar_lea.sflag [#allocation3], %s352
        %s354 = sand.u32 %s93, 1
        %s355 = smul.addr %s354, 8
        %s356 = scalar_lea.vmem [#allocation2], %s355
        // Predicated region
        $region33: #{tpu_custom_call.1} parent=31 // pred_check
          %p357 = pneg %p103
        $region34: #{tpu_custom_call.1} parent=31 // pred_check_branch
          %359 = sbr.rel (%p357) target = $region36
        $region35: #{tpu_custom_call.1} parent=31 // pred_region
          %s361 = ssub.s32 128, 128
          %362 = vsyncadd %s353, %s361
          %s363 = smul.addr %s17, 128
          %s364 = scalar_lea.hbm %s3, %s363
          %s366 = sshll.u32 %s356, 4
          %s367 = int_to_ptr.vmem [resolvable:$true] %s366
          %369 = dma.vmem_to_hbm [thread:$0]  %s367, 128, %s364, %s353
        $region36: #{tpu_custom_call.1} parent=31 // pred_fallthru
          _
      $region32: #{tpu_custom_call.1} parent=5 // pred_fallthru
        _
      %p370 = scmp.le.s32.totalorder 2, %s12
      // Predicated region
      $region37: #{tpu_custom_call.1} parent=5 // pred_check
        %p371 = pneg %p370
      $region38: #{tpu_custom_call.1} parent=5 // pred_check_branch
        %373 = sbr.rel (%p371) target = $region40
      $region39: #{tpu_custom_call.1} parent=5 // pred_region
        %s374 = ssub.s32 %s12, 2
        // Predicated region
        $region41: #{tpu_custom_call.1} parent=39 // pred_check
          %p375 = pneg %p109
        $region42: #{tpu_custom_call.1} parent=39 // pred_check_branch
          %377 = sbr.rel (%p375) target = $region44
        $region43: #{tpu_custom_call.1} parent=39 // pred_region
          %s378 = sand.u32 %s94, 1
          %s379 = scalar_lea.sflag [#allocation3], %s378
          %s380 = sand.u32 %s94, 1
          %s381 = smul.addr %s380, 8
          %s382 = scalar_lea.vmem [#allocation2], %s381
          %383 = dma.done %s379, 128
        $region44: #{tpu_custom_call.1} parent=39 // pred_fallthru
          _
      $region40: #{tpu_custom_call.1} parent=5 // pred_fallthru
        _
    $region6: #{tpu_custom_call.1} parent=1 // loop_footer
      %s16 = sadd.s32 1, %s12
    $region7: #{tpu_custom_call.1} parent=1 // loop_footer_branch
      %11 = sbr.rel target = $region3
    $region8: #{tpu_custom_call.1} parent=1 // loop_exit
      _
    %384 = vsyncpa [#allocation3], 1
    %s385 = scalar_lea.sflag [#allocation3], 1
    %386 = vsyncpa %s385, 1

</llo_original>
